<compile_context>
chip_gen: v6e
topology: v6e:2x2x1
jax: 0.10.0
libtpu: 0.0.40
codegen_flags: <defaults>
</compile_context>

<pallas_src>
import jax
import jax.numpy as jnp
from jax.experimental import pallas as pl
from jax.experimental.pallas import tpu as pltpu


def policy_kernel(x_ref, w1_ref, b1_ref, w2_ref, b2_ref, w3_ref, b3_ref, o_ref):
    """Fused fc1->ReLU->fc2->ReLU->fc3->softmax for one batch tile."""
    cdt = w1_ref.dtype                      # MXU operand dtype (f32 or bf16)
    x = x_ref[...]
    if x.dtype != cdt:                      # static dtype check (trace-time)
        x = x.astype(cdt)

    # fc1 + ReLU   (dropout p=0.3 is identity at inference)
    h1 = jnp.dot(x, w1_ref[...], preferred_element_type=jnp.float32) + b1_ref[...]
    h1 = jnp.maximum(h1, 0.0)

    # fc2 + ReLU   (dropout identity)
    h2 = jnp.dot(h1.astype(cdt), w2_ref[...],
                 preferred_element_type=jnp.float32) + b2_ref[...]
    h2 = jnp.maximum(h2, 0.0)

    # action logits + numerically-stable, exactly-normalized softmax (last dim)
    logits = jnp.dot(h2.astype(cdt), w3_ref[...],
                     preferred_element_type=jnp.float32) + b3_ref[...]
    m = jnp.max(logits, axis=-1, keepdims=True)
    e = jnp.exp(logits - m)
    s = jnp.sum(e, axis=-1, keepdims=True)
    o_ref[...] = (e / s).astype(o_ref.dtype)


def _round_up(v, m):
    return -(-v // m) * m


def policy_network_forward(x, params, *, block_b=2048, min_grid_steps=8):
    """x: (B, num_features) -> (B, num_actions) f32 action probabilities."""
    w1, b1, w2, b2, w3, b3 = params
    B, F = x.shape
    A = w3.shape[1]

    # Sublane multiple for the batch tile: 16 for bf16 operands (sublane packing).
    mult = 16 if (w1.dtype == jnp.bfloat16 or x.dtype == jnp.bfloat16) else 8

    # Largest tile <= block_b, but keep >= min_grid_steps grid steps when B is
    # big enough (v7x megacore sharding + input/output pipelining).
    bt = min(block_b, _round_up(B, mult))
    if B > mult * min_grid_steps:
        bt = min(bt, _round_up(pl.cdiv(B, min_grid_steps), mult))
    bt = max(mult, (bt // mult) * mult)

    grid = (pl.cdiv(B, bt),)   # no jnp.pad: boundary-block rows past B are dropped

    const = lambda i: (0, 0)   # weights/biases: VMEM-resident, fetched once
    return pl.pallas_call(
        policy_kernel,
        out_shape=jax.ShapeDtypeStruct((B, A), jnp.float32),
        grid=grid,
        in_specs=[
            pl.BlockSpec((bt, F), lambda i: (i, 0)),   # activations: batch-tiled
            pl.BlockSpec(w1.shape, const),
            pl.BlockSpec(b1.shape, const),
            pl.BlockSpec(w2.shape, const),
            pl.BlockSpec(b2.shape, const),
            pl.BlockSpec(w3.shape, const),
            pl.BlockSpec(b3.shape, const),
        ],
        # Narrow (num_actions-wide) output: minimal HBM writeback bytes; no
        # wrapper-side column slice afterwards.
        out_specs=pl.BlockSpec((bt, A), lambda i: (i, 0)),
        compiler_params=pltpu.CompilerParams(
            dimension_semantics=("parallel",)),        # v7x: both TensorCores
    )(x, w1, b1, w2, b2, w3, b3)


def init_params(key, num_features, num_actions, hidden_size,
                weight_dtype=jnp.float32):
    """nn.Linear-style init (uniform +/- 1/sqrt(fan_in)).  Weights are stored
    (in, out) = transpose of PyTorch; biases stay f32 (added after the f32
    matmul accumulation)."""
    h2 = hidden_size // 2
    keys = jax.random.split(key, 6)

    def linear(kw, kb, fan_in, fan_out):
        bound = 1.0 / (fan_in ** 0.5)
        w = jax.random.uniform(kw, (fan_in, fan_out), jnp.float32, -bound, bound)
        b = jax.random.uniform(kb, (1, fan_out), jnp.float32, -bound, bound)
        return w.astype(weight_dtype), b

    w1, b1 = linear(keys[0], keys[1], num_features, hidden_size)
    w2, b2 = linear(keys[2], keys[3], hidden_size, h2)
    w3, b3 = linear(keys[4], keys[5], h2, num_actions)
    return (w1, b1, w2, b2, w3, b3)


def reference_forward(x, params):
    """Pure-JAX f32 reference matching the PyTorch module in eval mode."""
    w1, b1, w2, b2, w3, b3 = [p.astype(jnp.float32) for p in params]
    x = x.astype(jnp.float32)
    h1 = jnp.maximum(x @ w1 + b1, 0.0)
    h2 = jnp.maximum(h1 @ w2 + b2, 0.0)
    return jax.nn.softmax(h2 @ w3 + b3, axis=-1)


if __name__ == "__main__":
    # Small shapes consistent with the module: num_features=16, hidden_size=32
    # (fc2 -> 16), num_actions=8.
    NUM_FEATURES, HIDDEN, NUM_ACTIONS = 16, 32, 8

    key = jax.random.PRNGKey(0)
    k_x, k_p = jax.random.split(key)

    # TODO(synk): training-mode dropout (random masking, p=0.3) is not implemented;
    # this kernel implements the eval/inference forward pass where dropout is identity.

    params = init_params(k_p, NUM_FEATURES, NUM_ACTIONS, HIDDEN)   # f32 weights

    # --- f32, batch divides the tile (bt=16, grid=(4,)) -----------------------
    B = 64
    x = jax.random.normal(k_x, (B, NUM_FEATURES), dtype=jnp.float32)
    out = jax.block_until_ready(policy_network_forward(x, params, block_b=16))
    ref = reference_forward(x, params)
    assert out.shape == (B, NUM_ACTIONS)
    assert jnp.allclose(jnp.sum(out, axis=-1), 1.0, atol=1e-3)
    assert jnp.allclose(out, ref, atol=3e-3, rtol=3e-3)

    # --- f32, ragged batch (boundary block partially out of bounds, no pad) ---
    B2 = 53
    x2 = x[:B2]
    out2 = jax.block_until_ready(policy_network_forward(x2, params, block_b=16))
    assert out2.shape == (B2, NUM_ACTIONS)
    assert jnp.allclose(jnp.sum(out2, axis=-1), 1.0, atol=1e-3)
    assert jnp.allclose(out2, ref[:B2], atol=3e-3, rtol=3e-3)

    # --- bf16 weights + bf16 activations (recommended on v6e/v7x) -------------
    params_bf16 = init_params(k_p, NUM_FEATURES, NUM_ACTIONS, HIDDEN,
                              weight_dtype=jnp.bfloat16)
    x_bf16 = x.astype(jnp.bfloat16)
    out_bf16 = jax.block_until_ready(
        policy_network_forward(x_bf16, params_bf16, block_b=32))   # bt=32, grid=(2,)
    assert out_bf16.shape == (B, NUM_ACTIONS)
    assert jnp.allclose(jnp.sum(out_bf16, axis=-1), 1.0, atol=1e-3)
    assert jnp.allclose(out_bf16, ref, atol=5e-2, rtol=5e-2)

    print("KERNEL_OK")
</pallas_src>

<mosaic_0001>
module attributes {stable_mosaic.version = 11 : i64} {
  func.func @policy_kernel(%arg0: i32, %arg1: memref<16x16xf32, #tpu.memory_space<vmem>>, %arg2: memref<16x32xf32, #tpu.memory_space<vmem>>, %arg3: memref<1x32xf32, #tpu.memory_space<vmem>>, %arg4: memref<32x16xf32, #tpu.memory_space<vmem>>, %arg5: memref<1x16xf32, #tpu.memory_space<vmem>>, %arg6: memref<16x8xf32, #tpu.memory_space<vmem>>, %arg7: memref<1x8xf32, #tpu.memory_space<vmem>>, %arg8: memref<16x8xf32, #tpu.memory_space<vmem>>) attributes {dimension_semantics = [#tpu.dimension_semantics<parallel>], iteration_bounds = array<i64: 4>, scalar_prefetch = 0 : i64, scratch_operands = 0 : i64, tpu.core_type = #tpu.core_type<tc>, window_params = [{transform_indices = @transform_0, window_bounds = array<i64: 16, 16>}, {pipeline_mode = #tpu.pipeline_mode<synchronous>, transform_indices = @transform_1, window_bounds = array<i64: 16, 32>}, {pipeline_mode = #tpu.pipeline_mode<synchronous>, transform_indices = @transform_2, window_bounds = array<i64: 1, 32>}, {pipeline_mode = #tpu.pipeline_mode<synchronous>, transform_indices = @transform_3, window_bounds = array<i64: 32, 16>}, {pipeline_mode = #tpu.pipeline_mode<synchronous>, transform_indices = @transform_4, window_bounds = array<i64: 1, 16>}, {pipeline_mode = #tpu.pipeline_mode<synchronous>, transform_indices = @transform_5, window_bounds = array<i64: 16, 8>}, {pipeline_mode = #tpu.pipeline_mode<synchronous>, transform_indices = @transform_6, window_bounds = array<i64: 1, 8>}, {transform_indices = @transform_7, window_bounds = array<i64: 16, 8>}]} {
    %c0 = arith.constant 0 : index
    %c0_0 = arith.constant 0 : index
    %0 = vector.load %arg1[%c0, %c0_0] : memref<16x16xf32, #tpu.memory_space<vmem>>, vector<16x16xf32>
    %c0_1 = arith.constant 0 : index
    %c0_2 = arith.constant 0 : index
    %1 = vector.load %arg2[%c0_1, %c0_2] : memref<16x32xf32, #tpu.memory_space<vmem>>, vector<16x32xf32>
    %cst = arith.constant dense<0.000000e+00> : vector<16x32xf32>
    %2 = tpu.matmul %0, %1, %cst {dimension_numbers = #tpu.dot_dimension_numbers<[1], [0], [0], [1], [0, 0, 1, 1], [], []>} : vector<16x16xf32>, vector<16x32xf32>, vector<16x32xf32> -> vector<16x32xf32>
    %c0_3 = arith.constant 0 : index
    %c0_4 = arith.constant 0 : index
    %3 = vector.load %arg3[%c0_3, %c0_4] : memref<1x32xf32, #tpu.memory_space<vmem>>, vector<1x32xf32>
    %4 = vector.broadcast %3 : vector<1x32xf32> to vector<16x32xf32>
    %5 = arith.addf %2, %4 : vector<16x32xf32>
    %cst_5 = arith.constant 0.000000e+00 : f32
    %6 = vector.broadcast %cst_5 : f32 to vector<16x32xf32>
    %7 = arith.maximumf %5, %6 : vector<16x32xf32>
    %c0_6 = arith.constant 0 : index
    %c0_7 = arith.constant 0 : index
    %8 = vector.load %arg4[%c0_6, %c0_7] : memref<32x16xf32, #tpu.memory_space<vmem>>, vector<32x16xf32>
    %cst_8 = arith.constant dense<0.000000e+00> : vector<16x16xf32>
    %9 = tpu.matmul %7, %8, %cst_8 {dimension_numbers = #tpu.dot_dimension_numbers<[1], [0], [0], [1], [0, 0, 1, 1], [], []>} : vector<16x32xf32>, vector<32x16xf32>, vector<16x16xf32> -> vector<16x16xf32>
    %c0_9 = arith.constant 0 : index
    %c0_10 = arith.constant 0 : index
    %10 = vector.load %arg5[%c0_9, %c0_10] : memref<1x16xf32, #tpu.memory_space<vmem>>, vector<1x16xf32>
    %11 = vector.broadcast %10 : vector<1x16xf32> to vector<16x16xf32>
    %12 = arith.addf %9, %11 : vector<16x16xf32>
    %cst_11 = arith.constant 0.000000e+00 : f32
    %13 = vector.broadcast %cst_11 : f32 to vector<16x16xf32>
    %14 = arith.maximumf %12, %13 : vector<16x16xf32>
    %c0_12 = arith.constant 0 : index
    %c0_13 = arith.constant 0 : index
    %15 = vector.load %arg6[%c0_12, %c0_13] : memref<16x8xf32, #tpu.memory_space<vmem>>, vector<16x8xf32>
    %cst_14 = arith.constant dense<0.000000e+00> : vector<16x8xf32>
    %16 = tpu.matmul %14, %15, %cst_14 {dimension_numbers = #tpu.dot_dimension_numbers<[1], [0], [0], [1], [0, 0, 1, 1], [], []>} : vector<16x16xf32>, vector<16x8xf32>, vector<16x8xf32> -> vector<16x8xf32>
    %c0_15 = arith.constant 0 : index
    %c0_16 = arith.constant 0 : index
    %17 = vector.load %arg7[%c0_15, %c0_16] : memref<1x8xf32, #tpu.memory_space<vmem>>, vector<1x8xf32>
    %18 = vector.broadcast %17 : vector<1x8xf32> to vector<16x8xf32>
    %19 = arith.addf %16, %18 : vector<16x8xf32>
    %cst_17 = arith.constant dense<0xFF800000> : vector<16xf32>
    %20 = vector.multi_reduction <maximumf>, %19, %cst_17 [1] : vector<16x8xf32> to vector<16xf32>
    %21 = vector.shape_cast %20 : vector<16xf32> to vector<16x1xf32>
    %22 = vector.broadcast %21 : vector<16x1xf32> to vector<16x8xf32>
    %23 = arith.subf %19, %22 : vector<16x8xf32>
    %24 = math.exp %23 : vector<16x8xf32>
    %cst_18 = arith.constant dense<0.000000e+00> : vector<16xf32>
    %25 = vector.multi_reduction <add>, %24, %cst_18 [1] : vector<16x8xf32> to vector<16xf32>
    %26 = vector.shape_cast %25 : vector<16xf32> to vector<16x1xf32>
    %27 = vector.broadcast %26 : vector<16x1xf32> to vector<16x8xf32>
    %28 = arith.divf %24, %27 : vector<16x8xf32>
    %c0_19 = arith.constant 0 : index
    %c0_20 = arith.constant 0 : index
    %29 = vector.load %arg8[%c0_19, %c0_20] : memref<16x8xf32, #tpu.memory_space<vmem>>, vector<16x8xf32>
    tpu.vector_store %arg8[%c0_19, %c0_20], %28 {strides = array<i32>} : memref<16x8xf32, #tpu.memory_space<vmem>>, vector<16x8xf32>,
    return
  }
  func.func @transform_0(%arg0: i32) -> (i32, i32) {
    %c0_i32 = arith.constant 0 : i32
    %c0_i32_0 = arith.constant 0 : i32
    return %arg0, %c0_i32 : i32, i32
  }
  func.func @transform_1(%arg0: i32) -> (i32, i32) {
    %c0_i32 = arith.constant 0 : i32
    %c0_i32_0 = arith.constant 0 : i32
    %c0_i32_1 = arith.constant 0 : i32
    return %c0_i32, %c0_i32_0 : i32, i32
  }
  func.func @transform_2(%arg0: i32) -> (i32, i32) {
    %c0_i32 = arith.constant 0 : i32
    %c0_i32_0 = arith.constant 0 : i32
    %c0_i32_1 = arith.constant 0 : i32
    return %c0_i32, %c0_i32_0 : i32, i32
  }
  func.func @transform_3(%arg0: i32) -> (i32, i32) {
    %c0_i32 = arith.constant 0 : i32
    %c0_i32_0 = arith.constant 0 : i32
    %c0_i32_1 = arith.constant 0 : i32
    return %c0_i32, %c0_i32_0 : i32, i32
  }
  func.func @transform_4(%arg0: i32) -> (i32, i32) {
    %c0_i32 = arith.constant 0 : i32
    %c0_i32_0 = arith.constant 0 : i32
    %c0_i32_1 = arith.constant 0 : i32
    return %c0_i32, %c0_i32_0 : i32, i32
  }
  func.func @transform_5(%arg0: i32) -> (i32, i32) {
    %c0_i32 = arith.constant 0 : i32
    %c0_i32_0 = arith.constant 0 : i32
    %c0_i32_1 = arith.constant 0 : i32
    return %c0_i32, %c0_i32_0 : i32, i32
  }
  func.func @transform_6(%arg0: i32) -> (i32, i32) {
    %c0_i32 = arith.constant 0 : i32
    %c0_i32_0 = arith.constant 0 : i32
    %c0_i32_1 = arith.constant 0 : i32
    return %c0_i32, %c0_i32_0 : i32, i32
  }
  func.func @transform_7(%arg0: i32) -> (i32, i32) {
    %c0_i32 = arith.constant 0 : i32
    %c0_i32_0 = arith.constant 0 : i32
    return %arg0, %c0_i32 : i32, i32
  }
}

</mosaic_0001>

<llo_original>
// kernel: tpu_custom_call.1
$region0: #{tpu_custom_call.1}
  #allocation0 [shape = 'u32[]', space=smem, size = 0x4, offset = 0x4, fixed_abs, tag = 'smem constant byte address 0x4 - core index']
  #allocation1 [shape = 'u32[144,128]{1,0:T(1,128)}', space=vmem, size = 0x12000, scoped, tag = 'internal scratch']
  %s0 = inlined_call_operand.vmem [shape: f32[64,16], index: 0, kind: input, shape index: {}]
  %s1 = inlined_call_operand.vmem [shape: f32[16,32], index: 1, kind: input, shape index: {}]
  %s2 = inlined_call_operand.vmem [shape: f32[1,32], index: 2, kind: input, shape index: {}]
  %s3 = inlined_call_operand.vmem [shape: f32[32,16], index: 3, kind: input, shape index: {}]
  %s4 = inlined_call_operand.vmem [shape: f32[1,16], index: 4, kind: input, shape index: {}]
  %s5 = inlined_call_operand.vmem [shape: f32[16,8], index: 5, kind: input, shape index: {}]
  %s6 = inlined_call_operand.vmem [shape: f32[1,8], index: 6, kind: input, shape index: {}]
  %s7 = inlined_call_operand.vmem [shape: f32[64,8], index: 7, kind: output, shape index: {}]
  %s8 = sld [smem:[#allocation0]]
  $region61: #{tpu_custom_call.1} parent=0
    _
  %s10 = ssub.s32 1, %s8
  %s11 = scalar_select 0, %s10, %s8
  loop: start=0, step=1, limit=6
  $region2: #{tpu_custom_call.1} parent=0 // loop_pre_header
    _
  $region3: #{tpu_custom_call.1} parent=0 // loop_header
    %s13 = sphi 0, %s17
    %p14 = scmp.ge.s32.totalorder %s13, 6
    %s23 = sphi 0, %s25
    %s26 = sphi 0, %s23
    %s27 = sphi 0, %s26
    %s43 = sphi 0, %s27
    %s47 = sphi 0, %s47
    %s49 = sphi 0, %s47
    %s50 = sphi 0, %s49
    %s64 = sphi 0, %s50
    %s68 = sphi 0, %s68
    %s70 = sphi 0, %s68
    %s71 = sphi 0, %s70
    %s85 = sphi 0, %s71
    %s89 = sphi 0, %s89
    %s91 = sphi 0, %s89
    %s92 = sphi 0, %s91
    %s106 = sphi 0, %s92
    %s110 = sphi 0, %s110
    %s112 = sphi 0, %s110
    %s113 = sphi 0, %s112
    %s127 = sphi 0, %s113
    %s131 = sphi 0, %s131
    %s133 = sphi 0, %s131
    %s134 = sphi 0, %s133
    %s148 = sphi 0, %s134
    %s152 = sphi 0, %s152
    %s154 = sphi 0, %s152
    %s155 = sphi 0, %s154
    %s169 = sphi 0, %s155
    %s175 = sphi 0, %s177
    %s178 = sphi 0, %s175
    %s179 = sphi 0, %s178
    %s195 = sphi 0, %s179
  $region4: #{tpu_custom_call.1} parent=0 // loop_header_branch
    %16 = sbr.rel (%p14) target = $region8
  $region5: #{tpu_custom_call.1} parent=0 // loop_body
    %s18 = ssub.s32 %s13, 1
    %s19 = ssub.s32 %s13, 2
    %s20 = sadd.s32 %s13, 1
    %s21 = ssub.s32 %s13, %s20
    %p22 = scmp.eq.s32.totalorder %s21, 0
    %s24 = sadd.s32 %s23, 1
    %s25 = scalar_select %p22, %s23, %s24
    %p28 = pneg %p22
    %p29 = scmp.eq.s32.totalorder %s13, 3
    %p30 = por %p28, %p29
    %p31 = scmp.ne.s32.totalorder %s23, %s26
    %p32 = scmp.eq.s32.totalorder %s13, 0
    %p33 = por %p31, %p32
    %p34 = scmp.ne.s32.totalorder %s23, %s26
    %p35 = scmp.eq.s32.totalorder %s18, 3
    %p36 = por %p34, %p35
    %p37 = scmp.ne.s32.totalorder %s26, %s27
    %p38 = scmp.eq.s32.totalorder %s18, 0
    %p39 = por %p37, %p38
    %p40 = scmp.ne.s32.totalorder %s26, %s27
    %p41 = scmp.eq.s32.totalorder %s19, 3
    %p42 = por %p40, %p41
    %p44 = scmp.ne.s32.totalorder %s27, %s43
    %p45 = scmp.eq.s32.totalorder %s19, 0
    %p46 = por %p44, %p45
    %s48 = sadd.s32 %s47, 1
    %p51 = scmp.eq.s32.totalorder %s13, 3
    %p52 = scmp.ne.s32.totalorder %s47, %s49
    %p53 = scmp.eq.s32.totalorder %s13, 0
    %p54 = por %p52, %p53
    %p55 = scmp.ne.s32.totalorder %s47, %s49
    %p56 = scmp.eq.s32.totalorder %s18, 3
    %p57 = por %p55, %p56
    %p58 = scmp.ne.s32.totalorder %s49, %s50
    %p59 = scmp.eq.s32.totalorder %s18, 0
    %p60 = por %p58, %p59
    %p61 = scmp.ne.s32.totalorder %s49, %s50
    %p62 = scmp.eq.s32.totalorder %s19, 3
    %p63 = por %p61, %p62
    %p65 = scmp.ne.s32.totalorder %s50, %s64
    %p66 = scmp.eq.s32.totalorder %s19, 0
    %p67 = por %p65, %p66
    %s69 = sadd.s32 %s68, 1
    %p72 = scmp.eq.s32.totalorder %s13, 3
    %p73 = scmp.ne.s32.totalorder %s68, %s70
    %p74 = scmp.eq.s32.totalorder %s13, 0
    %p75 = por %p73, %p74
    %p76 = scmp.ne.s32.totalorder %s68, %s70
    %p77 = scmp.eq.s32.totalorder %s18, 3
    %p78 = por %p76, %p77
    %p79 = scmp.ne.s32.totalorder %s70, %s71
    %p80 = scmp.eq.s32.totalorder %s18, 0
    %p81 = por %p79, %p80
    %p82 = scmp.ne.s32.totalorder %s70, %s71
    %p83 = scmp.eq.s32.totalorder %s19, 3
    %p84 = por %p82, %p83
    %p86 = scmp.ne.s32.totalorder %s71, %s85
    %p87 = scmp.eq.s32.totalorder %s19, 0
    %p88 = por %p86, %p87
    %s90 = sadd.s32 %s89, 1
    %p93 = scmp.eq.s32.totalorder %s13, 3
    %p94 = scmp.ne.s32.totalorder %s89, %s91
    %p95 = scmp.eq.s32.totalorder %s13, 0
    %p96 = por %p94, %p95
    %p97 = scmp.ne.s32.totalorder %s89, %s91
    %p98 = scmp.eq.s32.totalorder %s18, 3
    %p99 = por %p97, %p98
    %p100 = scmp.ne.s32.totalorder %s91, %s92
    %p101 = scmp.eq.s32.totalorder %s18, 0
    %p102 = por %p100, %p101
    %p103 = scmp.ne.s32.totalorder %s91, %s92
    %p104 = scmp.eq.s32.totalorder %s19, 3
    %p105 = por %p103, %p104
    %p107 = scmp.ne.s32.totalorder %s92, %s106
    %p108 = scmp.eq.s32.totalorder %s19, 0
    %p109 = por %p107, %p108
    %s111 = sadd.s32 %s110, 1
    %p114 = scmp.eq.s32.totalorder %s13, 3
    %p115 = scmp.ne.s32.totalorder %s110, %s112
    %p116 = scmp.eq.s32.totalorder %s13, 0
    %p117 = por %p115, %p116
    %p118 = scmp.ne.s32.totalorder %s110, %s112
    %p119 = scmp.eq.s32.totalorder %s18, 3
    %p120 = por %p118, %p119
    %p121 = scmp.ne.s32.totalorder %s112, %s113
    %p122 = scmp.eq.s32.totalorder %s18, 0
    %p123 = por %p121, %p122
    %p124 = scmp.ne.s32.totalorder %s112, %s113
    %p125 = scmp.eq.s32.totalorder %s19, 3
    %p126 = por %p124, %p125
    %p128 = scmp.ne.s32.totalorder %s113, %s127
    %p129 = scmp.eq.s32.totalorder %s19, 0
    %p130 = por %p128, %p129
    %s132 = sadd.s32 %s131, 1
    %p135 = scmp.eq.s32.totalorder %s13, 3
    %p136 = scmp.ne.s32.totalorder %s131, %s133
    %p137 = scmp.eq.s32.totalorder %s13, 0
    %p138 = por %p136, %p137
    %p139 = scmp.ne.s32.totalorder %s131, %s133
    %p140 = scmp.eq.s32.totalorder %s18, 3
    %p141 = por %p139, %p140
    %p142 = scmp.ne.s32.totalorder %s133, %s134
    %p143 = scmp.eq.s32.totalorder %s18, 0
    %p144 = por %p142, %p143
    %p145 = scmp.ne.s32.totalorder %s133, %s134
    %p146 = scmp.eq.s32.totalorder %s19, 3
    %p147 = por %p145, %p146
    %p149 = scmp.ne.s32.totalorder %s134, %s148
    %p150 = scmp.eq.s32.totalorder %s19, 0
    %p151 = por %p149, %p150
    %s153 = sadd.s32 %s152, 1
    %p156 = scmp.eq.s32.totalorder %s13, 3
    %p157 = scmp.ne.s32.totalorder %s152, %s154
    %p158 = scmp.eq.s32.totalorder %s13, 0
    %p159 = por %p157, %p158
    %p160 = scmp.ne.s32.totalorder %s152, %s154
    %p161 = scmp.eq.s32.totalorder %s18, 3
    %p162 = por %p160, %p161
    %p163 = scmp.ne.s32.totalorder %s154, %s155
    %p164 = scmp.eq.s32.totalorder %s18, 0
    %p165 = por %p163, %p164
    %p166 = scmp.ne.s32.totalorder %s154, %s155
    %p167 = scmp.eq.s32.totalorder %s19, 3
    %p168 = por %p166, %p167
    %p170 = scmp.ne.s32.totalorder %s155, %s169
    %p171 = scmp.eq.s32.totalorder %s19, 0
    %p172 = por %p170, %p171
    %s173 = ssub.s32 %s13, %s20
    %p174 = scmp.eq.s32.totalorder %s173, 0
    %s176 = sadd.s32 %s175, 1
    %s177 = scalar_select %p174, %s175, %s176
    %p180 = pneg %p174
    %p181 = scmp.eq.s32.totalorder %s13, 3
    %p182 = por %p180, %p181
    %p183 = scmp.ne.s32.totalorder %s175, %s178
    %p184 = scmp.eq.s32.totalorder %s13, 0
    %p185 = por %p183, %p184
    %p186 = scmp.ne.s32.totalorder %s175, %s178
    %p187 = scmp.eq.s32.totalorder %s18, 3
    %p188 = por %p186, %p187
    %p189 = scmp.ne.s32.totalorder %s178, %s179
    %p190 = scmp.eq.s32.totalorder %s18, 0
    %p191 = por %p189, %p190
    %p192 = scmp.ne.s32.totalorder %s178, %s179
    %p193 = scmp.eq.s32.totalorder %s19, 3
    %p194 = por %p192, %p193
    %p196 = scmp.ne.s32.totalorder %s179, %s195
    %p197 = scmp.eq.s32.totalorder %s19, 0
    %p198 = por %p196, %p197
    %p199 = scmp.le.s32.totalorder 1, %s13
    %p200 = scmp.lt.s32.totalorder %s13, 5
    %p201 = pnand %p199, %p200
    %p202 = pneg %p201
    // Predicated region
    $region9: #{tpu_custom_call.1} parent=5 // pred_check
      _
    $region10: #{tpu_custom_call.1} parent=5 // pred_check_branch
      %204 = sbr.rel (%p201) target = $region12
    $region11: #{tpu_custom_call.1} parent=5 // pred_region
      %s205 = ssub.s32 %s13, 1
      // Predicated region
      $region13: #{tpu_custom_call.1} parent=11 // pred_check
        %p206 = pneg %p60
      $region14: #{tpu_custom_call.1} parent=11 // pred_check_branch
        %208 = sbr.rel (%p206) target = $region16
      $region15: #{tpu_custom_call.1} parent=11 // pred_region
        _
      $region16: #{tpu_custom_call.1} parent=11 // pred_fallthru
        _
      // Predicated region
      $region17: #{tpu_custom_call.1} parent=11 // pred_check
        %p209 = pneg %p81
      $region18: #{tpu_custom_call.1} parent=11 // pred_check_branch
        %211 = sbr.rel (%p209) target = $region20
      $region19: #{tpu_custom_call.1} parent=11 // pred_region
        _
      $region20: #{tpu_custom_call.1} parent=11 // pred_fallthru
        _
      // Predicated region
      $region21: #{tpu_custom_call.1} parent=11 // pred_check
        %p212 = pneg %p102
      $region22: #{tpu_custom_call.1} parent=11 // pred_check_branch
        %214 = sbr.rel (%p212) target = $region24
      $region23: #{tpu_custom_call.1} parent=11 // pred_region
        _
      $region24: #{tpu_custom_call.1} parent=11 // pred_fallthru
        _
      // Predicated region
      $region25: #{tpu_custom_call.1} parent=11 // pred_check
        %p215 = pneg %p123
      $region26: #{tpu_custom_call.1} parent=11 // pred_check_branch
        %217 = sbr.rel (%p215) target = $region28
      $region27: #{tpu_custom_call.1} parent=11 // pred_region
        _
      $region28: #{tpu_custom_call.1} parent=11 // pred_fallthru
        _
      // Predicated region
      $region29: #{tpu_custom_call.1} parent=11 // pred_check
        %p218 = pneg %p144
      $region30: #{tpu_custom_call.1} parent=11 // pred_check_branch
        %220 = sbr.rel (%p218) target = $region32
      $region31: #{tpu_custom_call.1} parent=11 // pred_region
        _
      $region32: #{tpu_custom_call.1} parent=11 // pred_fallthru
        _
      // Predicated region
      $region33: #{tpu_custom_call.1} parent=11 // pred_check
        %p221 = pneg %p165
      $region34: #{tpu_custom_call.1} parent=11 // pred_check_branch
        %223 = sbr.rel (%p221) target = $region36
      $region35: #{tpu_custom_call.1} parent=11 // pred_region
        _
      $region36: #{tpu_custom_call.1} parent=11 // pred_fallthru
        _
    $region12: #{tpu_custom_call.1} parent=5 // pred_fallthru
      _
    %p224 = scmp.lt.s32.totalorder %s13, 4
    // Predicated region
    $region37: #{tpu_custom_call.1} parent=5 // pred_check
      %p225 = pneg %p224
    $region38: #{tpu_custom_call.1} parent=5 // pred_check_branch
      %227 = sbr.rel (%p225) target = $region40
    $region39: #{tpu_custom_call.1} parent=5 // pred_region
      // Predicated region
      $region41: #{tpu_custom_call.1} parent=39 // pred_check
        %p228 = pneg %p33
      $region42: #{tpu_custom_call.1} parent=39 // pred_check_branch
        %230 = sbr.rel (%p228) target = $region44
      $region43: #{tpu_custom_call.1} parent=39 // pred_region
        %s231 = smul.u32 2, %s13
        %p232 = scmp.lt.s32.totalorder %s231, 7
        %s233 = scalar_select %p232, %s231, 7
        %s234 = smul.addr %s233, 8
        %s235 = scalar_lea.vmem %s0, %s234
        %s236 = smul.u32 2, %s13
      $region44: #{tpu_custom_call.1} parent=39 // pred_fallthru
        _
    $region40: #{tpu_custom_call.1} parent=5 // pred_fallthru
      _
    %p237 = scmp.le.s32.totalorder 1, %s13
    %p238 = scmp.lt.s32.totalorder %s13, 5
    %p239 = pnand %p237, %p238
    %p240 = pneg %p239
    // Predicated region
    $region45: #{tpu_custom_call.1} parent=5 // pred_check
      _
    $region46: #{tpu_custom_call.1} parent=5 // pred_check_branch
      %242 = sbr.rel (%p239) target = $region48
    $region47: #{tpu_custom_call.1} parent=5 // pred_region
      %s243 = ssub.s32 %s13, 1
      %s244 = smul.u32 2, %s18
      %p245 = scmp.lt.s32.totalorder %s244, 7
      %s246 = scalar_select %p245, %s244, 7
      %s247 = smul.addr %s246, 8
      %s248 = scalar_lea.vmem %s0, %s247
      %p249 = pneg %p39
      %p250 = pneg %p36
      %p251 = pneg %p60
      %p252 = pneg %p57
      %p253 = pneg %p81
      %p254 = pneg %p78
      %p255 = pneg %p102
      %p256 = pneg %p99
      %p257 = pneg %p123
      %p258 = pneg %p120
      %p259 = pneg %p144
      %p260 = pneg %p141
      %p261 = pneg %p165
      %p262 = pneg %p162
      %p263 = pneg %p191
      %p264 = pneg %p188
      %s265 = smul.u32 2, %s18
      %p266 = scmp.lt.s32.totalorder %s265, 7
      %s267 = scalar_select %p266, %s265, 7
      %s268 = smul.addr %s267, 8
      %s269 = scalar_lea.vmem %s7, %s268
      %s270 = smul.u32 2, %s18
      %p271 = scmp.lt.s32.totalorder %s270, 7
      %s272 = scalar_select %p271, %s270, 7
      %s273 = smul.addr %s272, 8
      %s274 = scalar_lea.vmem %s0, %s273
      %s275 = smul.u32 2, %s18
      %s276 = smul.u32 2, %s18
      %p277 = scmp.lt.s32.totalorder %s276, 7
      %s278 = scalar_select %p277, %s276, 7
      %s279 = smul.addr %s278, 8
      %s280 = scalar_lea.vmem %s7, %s279
      %s281 = smul.u32 2, %s18
      %v282 = vld [vmem:[%s274] sm:$0xff]
      %v283 = vld [vmem:[%s274 + $0x8] sm:$0xff]
      %v284 = vld [vmem:[%s1] sm:$0xff]
      %v285 = vld [vmem:[%s1 + $0x8] sm:$0xff]
      %v286 = vld [vmem:[%s2] sm:$0x1]
      %v288 = vlaneseq
      %v289 = vshrl.u32 %v288, 7
      %v290 = vsub.s32 0, %v289
      %v291 = vrot.slane %v286, %v290
      %vm293 = vcmask 130048
      %v295 = vsel %vm293, %v282, 0
      %v298 = vsel %vm293, %v283, 0
      %300 = vmatprep.subr.mxu0 0.0
      %301 = vmatpush1.msra.mxu0 0.0
      %302 = vmatprep.subr.mxu0 0.0
      %303 = vmatpush1.msra.mxu0 0.0
      %304 = vmatprep.subr.mxu0 0.0
      %305 = vmatpush1.msra.mxu0 0.0
      %306 = vmatprep.subr.mxu0 0.0
      %307 = vmatpush1.msra.mxu0 0.0
      %308 = vmatprep.subr.mxu0 0.0
      %309 = vmatpush1.msra.mxu0 0.0
      %310 = vmatprep.subr.mxu0 0.0
      %311 = vmatpush1.msra.mxu0 0.0
      %312 = vmatprep.subr.mxu0 0.0
      %313 = vmatpush1.msra.mxu0 0.0
      %314 = vmatprep.subr.mxu0 0.0
      %315 = vmatpush1.msra.mxu0 0.0
      %316 = vmatprep.subr.mxu0 0.0
      %317 = vmatpush1.msra.mxu0 0.0
      %318 = vmatprep.subr.mxu0 0.0
      %319 = vmatpush1.msra.mxu0 0.0
      %320 = vmatprep.subr.mxu0 0.0
      %321 = vmatpush1.msra.mxu0 0.0
      %322 = vmatprep.subr.mxu0 0.0
      %323 = vmatpush1.msra.mxu0 0.0
      %324 = vmatprep.subr.mxu0 0.0
      %325 = vmatpush1.msra.mxu0 0.0
      %326 = vmatprep.subr.mxu0 0.0
      %327 = vmatpush1.msra.mxu0 0.0
      %328 = vmatprep.subr.mxu0 0.0
      %329 = vmatpush1.msra.mxu0 %v285
      %330 = vmatprep.subr.mxu0 0.0
      %331 = vmatpush1.msra.mxu0 %v284
      %332 = vmatprep.subr.mxu0 0.0
      %333 = vmatpush2.msra.mxu0 0.0
      %334 = vmatprep.subr.mxu0 0.0
      %335 = vmatpush2.msra.mxu0 0.0
      %336 = vmatprep.subr.mxu0 0.0
      %337 = vmatpush2.msra.mxu0 0.0
      %338 = vmatprep.subr.mxu0 0.0
      %339 = vmatpush2.msra.mxu0 0.0
      %340 = vmatprep.subr.mxu0 0.0
      %341 = vmatpush2.msra.mxu0 0.0
      %342 = vmatprep.subr.mxu0 0.0
      %343 = vmatpush2.msra.mxu0 0.0
      %344 = vmatprep.subr.mxu0 0.0
      %345 = vmatpush2.msra.mxu0 0.0
      %346 = vmatprep.subr.mxu0 0.0
      %347 = vmatpush2.msra.mxu0 0.0
      %348 = vmatprep.subr.mxu0 0.0
      %349 = vmatpush2.msra.mxu0 0.0
      %350 = vmatprep.subr.mxu0 0.0
      %351 = vmatpush2.msra.mxu0 0.0
      %352 = vmatprep.subr.mxu0 0.0
      %353 = vmatpush2.msra.mxu0 0.0
      %354 = vmatprep.subr.mxu0 0.0
      %355 = vmatpush2.msra.mxu0 0.0
      %356 = vmatprep.subr.mxu0 0.0
      %357 = vmatpush2.msra.mxu0 0.0
      %358 = vmatprep.subr.mxu0 0.0
      %359 = vmatpush2.msra.mxu0 0.0
      %360 = vmatprep.subr.mxu0 0.0
      %361 = vmatpush2.msra.mxu0 0.0
      %362 = vmatprep.subr.mxu0 0.0
      %363 = vmatpush2.msra.mxu0 0.0
      %364 = vmatprep.mubr.f32.mxu0 0.0
      %365 = vmatmul.mubr.f32.gmra.mxu0 %v295
      %v366 = vpop.f32.mrf.mxu0
      %v367 = vadd.f32 %v291, %v366
      %v368 = vpop.f32.mrf.mxu0
      %369 = vmatprep.mubr.f32.mxu0 0.0
      %370 = vmatmul.mubr.f32.gmra.mxu0 %v298
      %v371 = vpop.f32.mrf.mxu0
      %v372 = vadd.f32 %v291, %v371
      %v373 = vpop.f32.mrf.mxu0
      %374 = vdwg.mxu0
      %v375 = vmax.f32 %v367, 0.0
      %v376 = vmax.f32 %v372, 0.0
      %v377 = vld [vmem:[%s3] sm:$0xff]
      %v378 = vld [vmem:[%s3 + $0x8] sm:$0xff]
      %v379 = vld [vmem:[%s3 + $0x10] sm:$0xff]
      %v380 = vld [vmem:[%s3 + $0x18] sm:$0xff]
      %v381 = vld [vmem:[%s4] sm:$0x1]
      %v383 = vlaneseq
      %v384 = vshrl.u32 %v383, 7
      %v385 = vsub.s32 0, %v384
      %v386 = vrot.slane %v381, %v385
      %vm388 = vcmask 261120
      %v390 = vsel %vm388, %v375, 0
      %v393 = vsel %vm388, %v376, 0
      %395 = vmatprep.subr.mxu0 0.0
      %396 = vmatpush1.msra.mxu0 0.0
      %397 = vmatprep.subr.mxu0 0.0
      %398 = vmatpush1.msra.mxu0 0.0
      %399 = vmatprep.subr.mxu0 0.0
      %400 = vmatpush1.msra.mxu0 0.0
      %401 = vmatprep.subr.mxu0 0.0
      %402 = vmatpush1.msra.mxu0 0.0
      %403 = vmatprep.subr.mxu0 0.0
      %404 = vmatpush1.msra.mxu0 0.0
      %405 = vmatprep.subr.mxu0 0.0
      %406 = vmatpush1.msra.mxu0 0.0
      %407 = vmatprep.subr.mxu0 0.0
      %408 = vmatpush1.msra.mxu0 0.0
      %409 = vmatprep.subr.mxu0 0.0
      %410 = vmatpush1.msra.mxu0 0.0
      %411 = vmatprep.subr.mxu0 0.0
      %412 = vmatpush1.msra.mxu0 0.0
      %413 = vmatprep.subr.mxu0 0.0
      %414 = vmatpush1.msra.mxu0 0.0
      %415 = vmatprep.subr.mxu0 0.0
      %416 = vmatpush1.msra.mxu0 0.0
      %417 = vmatprep.subr.mxu0 0.0
      %418 = vmatpush1.msra.mxu0 0.0
      %419 = vmatprep.subr.mxu0 0.0
      %420 = vmatpush1.msra.mxu0 %v380
      %421 = vmatprep.subr.mxu0 0.0
      %422 = vmatpush1.msra.mxu0 %v379
      %423 = vmatprep.subr.mxu0 0.0
      %424 = vmatpush1.msra.mxu0 %v378
      %425 = vmatprep.subr.mxu0 0.0
      %426 = vmatpush1.msra.mxu0 %v377
      %427 = vmatprep.subr.mxu0 0.0
      %428 = vmatpush2.msra.mxu0 0.0
      %429 = vmatprep.subr.mxu0 0.0
      %430 = vmatpush2.msra.mxu0 0.0
      %431 = vmatprep.subr.mxu0 0.0
      %432 = vmatpush2.msra.mxu0 0.0
      %433 = vmatprep.subr.mxu0 0.0
      %434 = vmatpush2.msra.mxu0 0.0
      %435 = vmatprep.subr.mxu0 0.0
      %436 = vmatpush2.msra.mxu0 0.0
      %437 = vmatprep.subr.mxu0 0.0
      %438 = vmatpush2.msra.mxu0 0.0
      %439 = vmatprep.subr.mxu0 0.0
      %440 = vmatpush2.msra.mxu0 0.0
      %441 = vmatprep.subr.mxu0 0.0
      %442 = vmatpush2.msra.mxu0 0.0
      %443 = vmatprep.subr.mxu0 0.0
      %444 = vmatpush2.msra.mxu0 0.0
      %445 = vmatprep.subr.mxu0 0.0
      %446 = vmatpush2.msra.mxu0 0.0
      %447 = vmatprep.subr.mxu0 0.0
      %448 = vmatpush2.msra.mxu0 0.0
      %449 = vmatprep.subr.mxu0 0.0
      %450 = vmatpush2.msra.mxu0 0.0
      %451 = vmatprep.subr.mxu0 0.0
      %452 = vmatpush2.msra.mxu0 0.0
      %453 = vmatprep.subr.mxu0 0.0
      %454 = vmatpush2.msra.mxu0 0.0
      %455 = vmatprep.subr.mxu0 0.0
      %456 = vmatpush2.msra.mxu0 0.0
      %457 = vmatprep.subr.mxu0 0.0
      %458 = vmatpush2.msra.mxu0 0.0
      %459 = vmatprep.mubr.f32.mxu0 0.0
      %460 = vmatmul.mubr.f32.gmra.mxu0 %v390
      %v461 = vpop.f32.mrf.mxu0
      %v462 = vadd.f32 %v386, %v461
      %v463 = vpop.f32.mrf.mxu0
      %464 = vmatprep.mubr.f32.mxu0 0.0
      %465 = vmatmul.mubr.f32.gmra.mxu0 %v393
      %v466 = vpop.f32.mrf.mxu0
      %v467 = vadd.f32 %v386, %v466
      %v468 = vpop.f32.mrf.mxu0
      %469 = vdwg.mxu0
      %v470 = vmax.f32 %v462, 0.0
      %v471 = vmax.f32 %v467, 0.0
      %v472 = vld [vmem:[%s5] sm:$0xff]
      %v473 = vld [vmem:[%s5 + $0x8] sm:$0xff]
      %v474 = vld [vmem:[%s6] sm:$0x1]
      %v476 = vlaneseq
      %v477 = vshrl.u32 %v476, 7
      %v478 = vsub.s32 0, %v477
      %v479 = vrot.slane %v474, %v478
      %v482 = vsel %vm293, %v470, 0
      %v485 = vsel %vm293, %v471, 0
      %487 = vmatprep.subr.mxu0 0.0
      %488 = vmatpush1.msra.mxu0 0.0
      %489 = vmatprep.subr.mxu0 0.0
      %490 = vmatpush1.msra.mxu0 0.0
      %491 = vmatprep.subr.mxu0 0.0
      %492 = vmatpush1.msra.mxu0 0.0
      %493 = vmatprep.subr.mxu0 0.0
      %494 = vmatpush1.msra.mxu0 0.0
      %495 = vmatprep.subr.mxu0 0.0
      %496 = vmatpush1.msra.mxu0 0.0
      %497 = vmatprep.subr.mxu0 0.0
      %498 = vmatpush1.msra.mxu0 0.0
      %499 = vmatprep.subr.mxu0 0.0
      %500 = vmatpush1.msra.mxu0 0.0
      %501 = vmatprep.subr.mxu0 0.0
      %502 = vmatpush1.msra.mxu0 0.0
      %503 = vmatprep.subr.mxu0 0.0
      %504 = vmatpush1.msra.mxu0 0.0
      %505 = vmatprep.subr.mxu0 0.0
      %506 = vmatpush1.msra.mxu0 0.0
      %507 = vmatprep.subr.mxu0 0.0
      %508 = vmatpush1.msra.mxu0 0.0
      %509 = vmatprep.subr.mxu0 0.0
      %510 = vmatpush1.msra.mxu0 0.0
      %511 = vmatprep.subr.mxu0 0.0
      %512 = vmatpush1.msra.mxu0 0.0
      %513 = vmatprep.subr.mxu0 0.0
      %514 = vmatpush1.msra.mxu0 0.0
      %515 = vmatprep.subr.mxu0 0.0
      %516 = vmatpush1.msra.mxu0 %v473
      %517 = vmatprep.subr.mxu0 0.0
      %518 = vmatpush1.msra.mxu0 %v472
      %519 = vmatprep.subr.mxu0 0.0
      %520 = vmatpush2.msra.mxu0 0.0
      %521 = vmatprep.subr.mxu0 0.0
      %522 = vmatpush2.msra.mxu0 0.0
      %523 = vmatprep.subr.mxu0 0.0
      %524 = vmatpush2.msra.mxu0 0.0
      %525 = vmatprep.subr.mxu0 0.0
      %526 = vmatpush2.msra.mxu0 0.0
      %527 = vmatprep.subr.mxu0 0.0
      %528 = vmatpush2.msra.mxu0 0.0
      %529 = vmatprep.subr.mxu0 0.0
      %530 = vmatpush2.msra.mxu0 0.0
      %531 = vmatprep.subr.mxu0 0.0
      %532 = vmatpush2.msra.mxu0 0.0
      %533 = vmatprep.subr.mxu0 0.0
      %534 = vmatpush2.msra.mxu0 0.0
      %535 = vmatprep.subr.mxu0 0.0
      %536 = vmatpush2.msra.mxu0 0.0
      %537 = vmatprep.subr.mxu0 0.0
      %538 = vmatpush2.msra.mxu0 0.0
      %539 = vmatprep.subr.mxu0 0.0
      %540 = vmatpush2.msra.mxu0 0.0
      %541 = vmatprep.subr.mxu0 0.0
      %542 = vmatpush2.msra.mxu0 0.0
      %543 = vmatprep.subr.mxu0 0.0
      %544 = vmatpush2.msra.mxu0 0.0
      %545 = vmatprep.subr.mxu0 0.0
      %546 = vmatpush2.msra.mxu0 0.0
      %547 = vmatprep.subr.mxu0 0.0
      %548 = vmatpush2.msra.mxu0 0.0
      %549 = vmatprep.subr.mxu0 0.0
      %550 = vmatpush2.msra.mxu0 0.0
      %551 = vmatprep.mubr.f32.mxu0 0.0
      %552 = vmatmul.mubr.f32.gmra.mxu0 %v482
      %v553 = vpop.f32.mrf.mxu0
      %v554 = vadd.f32 %v479, %v553
      %v555 = vpop.f32.mrf.mxu0
      %556 = vmatprep.mubr.f32.mxu0 0.0
      %557 = vmatmul.mubr.f32.gmra.mxu0 %v485
      %v558 = vpop.f32.mrf.mxu0
      %v559 = vadd.f32 %v479, %v558
      %v560 = vpop.f32.mrf.mxu0
      %561 = vdwg.mxu0
      %vm562 = vcmask 64512
      %v563 = vsel %vm562, %v554, -inf
      %564 = vmax.xlane.f32.xlu0 %v563
      %v565 = vpop.xlane.xlu0 %564
      %v566 = vsel %vm562, %v559, -inf
      %567 = vmax.xlane.f32.xlu0 %v566
      %v568 = vpop.xlane.xlu0 %567
      %v569 = vsub.f32 %v554, %v565
      %v570 = vsub.f32 %v559, %v568
      %v571 = vmul.f32 %v569, 1.442695
      %v572 = vpow.pop %v571
      %v573 = vmul.f32 %v570, 1.442695
      %v574 = vpow.pop %v573
      %v575 = vsel %vm562, %v572, 0.0
      %576 = vadd.xlane.f32.xlu0 %v575
      %v577 = vpop.xlane.xlu0 %576
      %v578 = vsel %vm562, %v574, 0.0
      %579 = vadd.xlane.f32.xlu0 %v578
      %v580 = vpop.xlane.xlu0 %579
      %v581 = vrcp.pop %v577
      %v582 = vmul.f32 %v572, %v581
      %v583 = vrcp.pop %v580
      %v584 = vmul.f32 %v574, %v583
      %585 = vst.msk [vmem:[%s280] sm:$0xff] %vm562, %v582
      %586 = vst.msk [vmem:[%s280 + $0x8] sm:$0xff] %vm562, %v584
      %s587 = smul.u32 2, %s18
      %p588 = scmp.lt.s32.totalorder %s587, 7
      %s589 = scalar_select %p588, %s587, 7
      %s590 = smul.addr %s589, 8
      %s591 = scalar_lea.vmem %s7, %s590
      // Predicated region
      $region49: #{tpu_custom_call.1} parent=47 // pred_check
        %p592 = pneg %p188
      $region50: #{tpu_custom_call.1} parent=47 // pred_check_branch
        %594 = sbr.rel (%p592) target = $region52
      $region51: #{tpu_custom_call.1} parent=47 // pred_region
        %s595 = smul.u32 2, %s18
      $region52: #{tpu_custom_call.1} parent=47 // pred_fallthru
        _
    $region48: #{tpu_custom_call.1} parent=5 // pred_fallthru
      _
    %p596 = scmp.le.s32.totalorder 2, %s13
    // Predicated region
    $region53: #{tpu_custom_call.1} parent=5 // pred_check
      %p597 = pneg %p596
    $region54: #{tpu_custom_call.1} parent=5 // pred_check_branch
      %599 = sbr.rel (%p597) target = $region56
    $region55: #{tpu_custom_call.1} parent=5 // pred_region
      %s600 = ssub.s32 %s13, 2
      // Predicated region
      $region57: #{tpu_custom_call.1} parent=55 // pred_check
        %p601 = pneg %p194
      $region58: #{tpu_custom_call.1} parent=55 // pred_check_branch
        %603 = sbr.rel (%p601) target = $region60
      $region59: #{tpu_custom_call.1} parent=55 // pred_region
        %s604 = smul.u32 2, %s19
        %p605 = scmp.lt.s32.totalorder %s604, 7
        %s606 = scalar_select %p605, %s604, 7
        %s607 = smul.addr %s606, 8
        %s608 = scalar_lea.vmem %s7, %s607
      $region60: #{tpu_custom_call.1} parent=55 // pred_fallthru
        _
    $region56: #{tpu_custom_call.1} parent=5 // pred_fallthru
      _
  $region6: #{tpu_custom_call.1} parent=0 // loop_footer
    %s17 = sadd.s32 1, %s13
  $region7: #{tpu_custom_call.1} parent=0 // loop_footer_branch
    %12 = sbr.rel target = $region3
  $region8: #{tpu_custom_call.1} parent=0 // loop_exit
    _

</llo_original>
